<compile_context>
chip_gen: v5e
topology: v5e:2x2
jax: 0.10.0
libtpu: 0.0.40
codegen_flags: <defaults>
</compile_context>

<pallas_src>
import functools

import jax
import jax.numpy as jnp
from jax.experimental import pallas as pl
from jax.experimental.pallas import tpu as pltpu

_LANE = 128  # hidden feature dims padded to multiples of this


# ----------------------------- Pallas kernels ------------------------------

def _softmax_rows(logits):
    """Numerically stable softmax over the last axis, f32 in / f32 out."""
    m = jnp.max(logits, axis=-1, keepdims=True)
    e = jnp.exp(logits - m)
    d = jnp.sum(e, axis=-1, keepdims=True)
    r = pl.reciprocal(d, approx=True)   # EUP slot (cheap)
    r = r * (2.0 - d * r)               # one Newton step -> ~f32 accuracy
    return e * r


def _fcnet3_kernel(x_ref, w1_ref, b1_ref, w2_ref, b2_ref, w3_ref, b3_ref,
                   o_ref):
    """hidden2 is not None: 3 Linear layers, 2 ReLUs, softmax over last axis."""
    cd = w1_ref.dtype
    x = x_ref[...].astype(cd)
    h1 = jnp.dot(x, w1_ref[...], preferred_element_type=jnp.float32) + b1_ref[...]
    h1 = jnp.maximum(h1, 0.0).astype(cd)
    h2 = jnp.dot(h1, w2_ref[...], preferred_element_type=jnp.float32) + b2_ref[...]
    h2 = jnp.maximum(h2, 0.0).astype(cd)
    logits = jnp.dot(h2, w3_ref[...], preferred_element_type=jnp.float32) + b3_ref[...]
    o_ref[...] = _softmax_rows(logits).astype(o_ref.dtype)


def _fcnet2_kernel(x_ref, w1_ref, b1_ref, w2_ref, b2_ref, o_ref):
    """hidden2 is None: 2 Linear layers, 1 ReLU, softmax over last axis."""
    cd = w1_ref.dtype
    x = x_ref[...].astype(cd)
    h1 = jnp.dot(x, w1_ref[...], preferred_element_type=jnp.float32) + b1_ref[...]
    h1 = jnp.maximum(h1, 0.0).astype(cd)
    logits = jnp.dot(h1, w2_ref[...], preferred_element_type=jnp.float32) + b2_ref[...]
    o_ref[...] = _softmax_rows(logits).astype(o_ref.dtype)


# ------------------------------ Wrapper -------------------------------------

def _round_up(n, m):
    return ((n + m - 1) // m) * m


@functools.partial(jax.jit, static_argnames=("tile_b", "compute_dtype"))
def fcnet_forward(x, params, *, tile_b=512, compute_dtype=jnp.bfloat16):
    """params: tuple of (W, b); W stored [in_features, out_features], b [1, out].

    tile_b: max rows per grid step.  compute_dtype: dtype fed to the MXU
    (bf16 default, f32 accumulation always).  Vector math stays f32.
    """
    batch, in_features = x.shape
    n_layers = len(params)
    out_features = params[-1][0].shape[1]
    compute_dtype = jnp.dtype(compute_dtype)

    # Feature dims: pad only the hidden dims to multiples of 128 (lane-dense
    # internal MXU feeds).  in_features and out_features stay unpadded — their
    # blocks equal the full array dims, which is legal.
    dims = [in_features] + [w.shape[1] for (w, _) in params]
    pdims = list(dims)
    for li in range(1, n_layers):          # hidden dims only
        pdims[li] = _round_up(dims[li], _LANE)

    # Weights cast once in the wrapper; biases stay f32.  Zero padding keeps
    # padded hidden activations exactly 0 through ReLU.
    flat = []
    for li, (w, b) in enumerate(params):
        w_p = jnp.pad(w, ((0, pdims[li] - w.shape[0]),
                          (0, pdims[li + 1] - w.shape[1]))).astype(compute_dtype)
        b_p = jnp.pad(b, ((0, 0), (0, pdims[li + 1] - b.shape[1]))).astype(jnp.float32)
        flat.extend([w_p, b_p])

    # Batch tile: if the whole batch fits in one tile, use it as-is (block ==
    # full dim -> no alignment constraint).  Otherwise round the tile to the
    # packed sublane count of the compute dtype (8 f32 / 16 bf16 / 32 int8).
    sub = max(8, 32 // compute_dtype.itemsize)
    if batch <= tile_b:
        tb = batch
    else:
        tb = _round_up(min(tile_b, batch), sub)
    pb = _round_up(batch, tb)
    nb = pb // tb
    x_in = x if pb == batch else jnp.pad(x, ((0, pb - batch), (0, 0)))

    x_spec = pl.BlockSpec((tb, in_features), lambda i: (i, 0))
    # Constant index_map + Buffered(1): weights/biases fetched once, stay
    # VMEM-resident across all grid steps, no double pipeline buffers.
    param_specs = [
        pl.BlockSpec(a.shape, lambda i: (0, 0), pipeline_mode=pl.Buffered(1))
        for a in flat
    ]
    out_spec = pl.BlockSpec((tb, out_features), lambda i: (i, 0))

    kernel = _fcnet3_kernel if n_layers == 3 else _fcnet2_kernel

    # Honest scheduling hint: actual (unpadded x / unpadded out) traffic.
    x_itemsize = jnp.dtype(x.dtype).itemsize
    param_bytes = sum(int(a.size) * a.dtype.itemsize for a in flat)
    cost = pl.CostEstimate(
        flops=2 * pb * sum(pdims[i] * pdims[i + 1] for i in range(n_layers)),
        transcendentals=pb * out_features,
        bytes_accessed=pb * in_features * x_itemsize + param_bytes
        + pb * out_features * x_itemsize,
    )

    # Explicit VMEM budget (portable to v7x's 64 MiB): double-buffered x/out
    # blocks + resident params + headroom for f32 intermediates.
    x_blk_bytes = tb * in_features * x_itemsize
    out_blk_bytes = tb * out_features * x_itemsize
    hid_bytes = tb * max(pdims[1:]) * 4
    vmem_needed = 2 * (x_blk_bytes + out_blk_bytes) + param_bytes + 4 * hid_bytes
    vmem_limit = int(min(max(2 * vmem_needed, 32 << 20), 64 << 20))

    out_p = pl.pallas_call(
        kernel,
        out_shape=jax.ShapeDtypeStruct((pb, out_features), x.dtype),
        grid_spec=pltpu.PrefetchScalarGridSpec(
            num_scalar_prefetch=0,
            grid=(nb,),
            in_specs=[x_spec] + param_specs,
            out_specs=out_spec,
        ),
        compiler_params=pltpu.CompilerParams(
            dimension_semantics=("parallel",),
            vmem_limit_bytes=vmem_limit,
        ),
        cost_estimate=cost,
    )(x_in, *flat)

    return out_p if pb == batch else out_p[:batch]


# ---------------------------- Params / reference ----------------------------

def init_fcnet_params(key, in_channels, hidden1, out_channels, hidden2=None,
                      dtype=jnp.float32):
    """Deterministic init mimicking nn.Linear default (uniform +-1/sqrt(fan_in)).

    Returns tuple of (W, b) with W stored as [in_features, out_features].
    """
    dims = [in_channels, hidden1]
    if hidden2 is not None:
        dims += [hidden2]
    dims += [out_channels]

    params = []
    for fan_in, fan_out in zip(dims[:-1], dims[1:]):
        key, kw, kb = jax.random.split(key, 3)
        bound = 1.0 / (fan_in ** 0.5)
        w = jax.random.uniform(kw, (fan_in, fan_out), dtype, -bound, bound)
        b = jax.random.uniform(kb, (1, fan_out), dtype, -bound, bound)
        params.append((w, b))
    return tuple(params)


def fcnet_reference(x, params):
    """Pure-JAX reference matching the PyTorch forward."""
    h = x
    for i, (w, b) in enumerate(params):
        h = h @ w + b
        if i < len(params) - 1:
            h = jnp.maximum(h, 0.0)
    return jax.nn.softmax(h, axis=1)


# ------------------------------- Main ----------------------------------------

if __name__ == "__main__":
    key = jax.random.PRNGKey(0)
    kx, kp3, kp2 = jax.random.split(key, 3)

    batch, in_ch, h1, h2, out_ch = 96, 16, 32, 32, 8

    x = jax.random.normal(kx, (batch, in_ch), jnp.float32)
    params3 = init_fcnet_params(kp3, in_ch, h1, out_ch, hidden2=h2)
    params2 = init_fcnet_params(kp2, in_ch, h1, out_ch, hidden2=None)

    ref3 = fcnet_reference(x, params3)
    ref2 = fcnet_reference(x, params2)

    # f32 MXU path, tile_b=48 -> 2 grid steps on batch=96 (exercises batch
    # tiling; on v7x both TensorCores get a step via the "parallel" axis).
    out3_f32 = jax.block_until_ready(
        fcnet_forward(x, params3, tile_b=48, compute_dtype=jnp.float32))
    assert out3_f32.shape == (batch, out_ch)
    assert jnp.allclose(out3_f32, ref3, atol=1e-4, rtol=1e-4), "3-layer f32 mismatch"
    assert jnp.allclose(jnp.sum(out3_f32, axis=1), jnp.ones((batch,)), atol=1e-4)

    # hidden2=None variant (2 Linear layers), f32.
    out2_f32 = jax.block_until_ready(
        fcnet_forward(x, params2, tile_b=48, compute_dtype=jnp.float32))
    assert out2_f32.shape == (batch, out_ch)
    assert jnp.allclose(out2_f32, ref2, atol=1e-4, rtol=1e-4), "2-layer f32 mismatch"

    # Default path: bf16 MXU feeds (f32 accumulation), single grid step.
    out3_bf16 = jax.block_until_ready(fcnet_forward(x, params3))
    assert out3_bf16.shape == (batch, out_ch)
    assert jnp.allclose(out3_bf16, ref3, atol=5e-2), "3-layer bf16 mismatch"

    print("KERNEL_OK")
</pallas_src>

<mosaic_0001>
module attributes {stable_mosaic.version = 11 : i64} {
  func.func @_fcnet3_kernel(%arg0: i32, %arg1: memref<48x16xf32, #tpu.memory_space<vmem>>, %arg2: memref<16x128xf32, #tpu.memory_space<vmem>>, %arg3: memref<1x128xf32, #tpu.memory_space<vmem>>, %arg4: memref<128x128xf32, #tpu.memory_space<vmem>>, %arg5: memref<1x128xf32, #tpu.memory_space<vmem>>, %arg6: memref<128x8xf32, #tpu.memory_space<vmem>>, %arg7: memref<1x8xf32, #tpu.memory_space<vmem>>, %arg8: memref<48x8xf32, #tpu.memory_space<vmem>>) attributes {dimension_semantics = [#tpu.dimension_semantics<parallel>], iteration_bounds = array<i64: 2>, scalar_prefetch = 0 : i64, scratch_operands = 0 : i64, tpu.core_type = #tpu.core_type<tc>, window_params = [{transform_indices = @transform_0, window_bounds = array<i64: 48, 16>}, {pipeline_mode = #tpu.pipeline_mode<synchronous>, transform_indices = @transform_1, window_bounds = array<i64: 16, 128>}, {pipeline_mode = #tpu.pipeline_mode<synchronous>, transform_indices = @transform_2, window_bounds = array<i64: 1, 128>}, {pipeline_mode = #tpu.pipeline_mode<synchronous>, transform_indices = @transform_3, window_bounds = array<i64: 128, 128>}, {pipeline_mode = #tpu.pipeline_mode<synchronous>, transform_indices = @transform_4, window_bounds = array<i64: 1, 128>}, {pipeline_mode = #tpu.pipeline_mode<synchronous>, transform_indices = @transform_5, window_bounds = array<i64: 128, 8>}, {pipeline_mode = #tpu.pipeline_mode<synchronous>, transform_indices = @transform_6, window_bounds = array<i64: 1, 8>}, {transform_indices = @transform_7, window_bounds = array<i64: 48, 8>}]} {
    %c0 = arith.constant 0 : index
    %c0_0 = arith.constant 0 : index
    %0 = vector.load %arg1[%c0, %c0_0] : memref<48x16xf32, #tpu.memory_space<vmem>>, vector<48x16xf32>
    %c0_1 = arith.constant 0 : index
    %c0_2 = arith.constant 0 : index
    %1 = vector.load %arg2[%c0_1, %c0_2] : memref<16x128xf32, #tpu.memory_space<vmem>>, vector<16x128xf32>
    %cst = arith.constant dense<0.000000e+00> : vector<48x128xf32>
    %2 = tpu.matmul %0, %1, %cst {dimension_numbers = #tpu.dot_dimension_numbers<[1], [0], [0], [1], [0, 0, 1, 1], [], []>} : vector<48x16xf32>, vector<16x128xf32>, vector<48x128xf32> -> vector<48x128xf32>
    %c0_3 = arith.constant 0 : index
    %c0_4 = arith.constant 0 : index
    %3 = vector.load %arg3[%c0_3, %c0_4] : memref<1x128xf32, #tpu.memory_space<vmem>>, vector<1x128xf32>
    %4 = vector.broadcast %3 : vector<1x128xf32> to vector<48x128xf32>
    %5 = arith.addf %2, %4 : vector<48x128xf32>
    %cst_5 = arith.constant 0.000000e+00 : f32
    %6 = vector.broadcast %cst_5 : f32 to vector<48x128xf32>
    %7 = arith.maximumf %5, %6 : vector<48x128xf32>
    %c0_6 = arith.constant 0 : index
    %c0_7 = arith.constant 0 : index
    %8 = vector.load %arg4[%c0_6, %c0_7] : memref<128x128xf32, #tpu.memory_space<vmem>>, vector<128x128xf32>
    %cst_8 = arith.constant dense<0.000000e+00> : vector<48x128xf32>
    %9 = tpu.matmul %7, %8, %cst_8 {dimension_numbers = #tpu.dot_dimension_numbers<[1], [0], [0], [1], [0, 0, 1, 1], [], []>} : vector<48x128xf32>, vector<128x128xf32>, vector<48x128xf32> -> vector<48x128xf32>
    %c0_9 = arith.constant 0 : index
    %c0_10 = arith.constant 0 : index
    %10 = vector.load %arg5[%c0_9, %c0_10] : memref<1x128xf32, #tpu.memory_space<vmem>>, vector<1x128xf32>
    %11 = vector.broadcast %10 : vector<1x128xf32> to vector<48x128xf32>
    %12 = arith.addf %9, %11 : vector<48x128xf32>
    %cst_11 = arith.constant 0.000000e+00 : f32
    %13 = vector.broadcast %cst_11 : f32 to vector<48x128xf32>
    %14 = arith.maximumf %12, %13 : vector<48x128xf32>
    %c0_12 = arith.constant 0 : index
    %c0_13 = arith.constant 0 : index
    %15 = vector.load %arg6[%c0_12, %c0_13] : memref<128x8xf32, #tpu.memory_space<vmem>>, vector<128x8xf32>
    %cst_14 = arith.constant dense<0.000000e+00> : vector<48x8xf32>
    %16 = tpu.matmul %14, %15, %cst_14 {dimension_numbers = #tpu.dot_dimension_numbers<[1], [0], [0], [1], [0, 0, 1, 1], [], []>} : vector<48x128xf32>, vector<128x8xf32>, vector<48x8xf32> -> vector<48x8xf32>
    %c0_15 = arith.constant 0 : index
    %c0_16 = arith.constant 0 : index
    %17 = vector.load %arg7[%c0_15, %c0_16] : memref<1x8xf32, #tpu.memory_space<vmem>>, vector<1x8xf32>
    %18 = vector.broadcast %17 : vector<1x8xf32> to vector<48x8xf32>
    %19 = arith.addf %16, %18 : vector<48x8xf32>
    %cst_17 = arith.constant dense<0xFF800000> : vector<48xf32>
    %20 = vector.multi_reduction <maximumf>, %19, %cst_17 [1] : vector<48x8xf32> to vector<48xf32>
    %21 = vector.shape_cast %20 : vector<48xf32> to vector<48x1xf32>
    %22 = vector.broadcast %21 : vector<48x1xf32> to vector<48x8xf32>
    %23 = arith.subf %19, %22 : vector<48x8xf32>
    %24 = math.exp %23 : vector<48x8xf32>
    %cst_18 = arith.constant dense<0.000000e+00> : vector<48xf32>
    %25 = vector.multi_reduction <add>, %24, %cst_18 [1] : vector<48x8xf32> to vector<48xf32>
    %26 = vector.shape_cast %25 : vector<48xf32> to vector<48x1xf32>
    %27 = tpu.reciprocal %26 {approx = true} : vector<48x1xf32> -> vector<48x1xf32>
    %28 = arith.mulf %26, %27 : vector<48x1xf32>
    %cst_19 = arith.constant 2.000000e+00 : f32
    %29 = vector.broadcast %cst_19 : f32 to vector<48x1xf32>
    %30 = arith.subf %29, %28 : vector<48x1xf32>
    %31 = arith.mulf %27, %30 : vector<48x1xf32>
    %32 = vector.broadcast %31 : vector<48x1xf32> to vector<48x8xf32>
    %33 = arith.mulf %24, %32 : vector<48x8xf32>
    %c0_20 = arith.constant 0 : index
    %c0_21 = arith.constant 0 : index
    %34 = vector.load %arg8[%c0_20, %c0_21] : memref<48x8xf32, #tpu.memory_space<vmem>>, vector<48x8xf32>
    tpu.vector_store %arg8[%c0_20, %c0_21], %33 {strides = array<i32>} : memref<48x8xf32, #tpu.memory_space<vmem>>, vector<48x8xf32>,
    return
  }
  func.func @transform_0(%arg0: i32) -> (i32, i32) {
    %c0_i32 = arith.constant 0 : i32
    %c0_i32_0 = arith.constant 0 : i32
    return %arg0, %c0_i32 : i32, i32
  }
  func.func @transform_1(%arg0: i32) -> (i32, i32) {
    %c0_i32 = arith.constant 0 : i32
    %c0_i32_0 = arith.constant 0 : i32
    %c0_i32_1 = arith.constant 0 : i32
    return %c0_i32, %c0_i32_0 : i32, i32
  }
  func.func @transform_2(%arg0: i32) -> (i32, i32) {
    %c0_i32 = arith.constant 0 : i32
    %c0_i32_0 = arith.constant 0 : i32
    %c0_i32_1 = arith.constant 0 : i32
    return %c0_i32, %c0_i32_0 : i32, i32
  }
  func.func @transform_3(%arg0: i32) -> (i32, i32) {
    %c0_i32 = arith.constant 0 : i32
    %c0_i32_0 = arith.constant 0 : i32
    %c0_i32_1 = arith.constant 0 : i32
    return %c0_i32, %c0_i32_0 : i32, i32
  }
  func.func @transform_4(%arg0: i32) -> (i32, i32) {
    %c0_i32 = arith.constant 0 : i32
    %c0_i32_0 = arith.constant 0 : i32
    %c0_i32_1 = arith.constant 0 : i32
    return %c0_i32, %c0_i32_0 : i32, i32
  }
  func.func @transform_5(%arg0: i32) -> (i32, i32) {
    %c0_i32 = arith.constant 0 : i32
    %c0_i32_0 = arith.constant 0 : i32
    %c0_i32_1 = arith.constant 0 : i32
    return %c0_i32, %c0_i32_0 : i32, i32
  }
  func.func @transform_6(%arg0: i32) -> (i32, i32) {
    %c0_i32 = arith.constant 0 : i32
    %c0_i32_0 = arith.constant 0 : i32
    %c0_i32_1 = arith.constant 0 : i32
    return %c0_i32, %c0_i32_0 : i32, i32
  }
  func.func @transform_7(%arg0: i32) -> (i32, i32) {
    %c0_i32 = arith.constant 0 : i32
    %c0_i32_0 = arith.constant 0 : i32
    return %arg0, %c0_i32 : i32, i32
  }
}

</mosaic_0001>

<llo_original>
// kernel: fcnet_forward.1
$region0: #{fcnet_forward.1}
  #allocation0 [shape = 'u32[]', space=smem, size = 0x4, offset = 0x4, fixed_abs, tag = 'smem constant byte address 0x4 - core index']
  #allocation1 [shape = 'u32[72,128]{1,0:T(1,128)}', space=vmem, size = 0x9000, scoped, tag = 'internal scratch']
  %s0 = inlined_call_operand.vmem [shape: f32[96,16], index: 0, kind: input, shape index: {}]
  %s1 = inlined_call_operand.vmem [shape: f32[16,128], index: 1, kind: input, shape index: {}]
  %s2 = inlined_call_operand.vmem [shape: f32[1,128], index: 2, kind: input, shape index: {}]
  %s3 = inlined_call_operand.vmem [shape: f32[128,128], index: 3, kind: input, shape index: {}]
  %s4 = inlined_call_operand.vmem [shape: f32[1,128], index: 4, kind: input, shape index: {}]
  %s5 = inlined_call_operand.vmem [shape: f32[128,8], index: 5, kind: input, shape index: {}]
  %s6 = inlined_call_operand.vmem [shape: f32[1,8], index: 6, kind: input, shape index: {}]
  %s7 = inlined_call_operand.vmem [shape: f32[96,8], index: 7, kind: output, shape index: {}]
  %s8 = sld [smem:[#allocation0]]
  $region61: #{fcnet_forward.1} parent=0
    _
  %s10 = ssub.s32 1, %s8
  %s11 = scalar_select 0, %s10, %s8
  loop: start=0, step=1, limit=4
  $region2: #{fcnet_forward.1} parent=0 // loop_pre_header
    _
  $region3: #{fcnet_forward.1} parent=0 // loop_header
    %s13 = sphi 0, %s17
    %p14 = scmp.ge.s32.totalorder %s13, 4
    %s23 = sphi 0, %s25
    %s26 = sphi 0, %s23
    %s27 = sphi 0, %s26
    %s43 = sphi 0, %s27
    %s47 = sphi 0, %s47
    %s49 = sphi 0, %s47
    %s50 = sphi 0, %s49
    %s64 = sphi 0, %s50
    %s68 = sphi 0, %s68
    %s70 = sphi 0, %s68
    %s71 = sphi 0, %s70
    %s85 = sphi 0, %s71
    %s89 = sphi 0, %s89
    %s91 = sphi 0, %s89
    %s92 = sphi 0, %s91
    %s106 = sphi 0, %s92
    %s110 = sphi 0, %s110
    %s112 = sphi 0, %s110
    %s113 = sphi 0, %s112
    %s127 = sphi 0, %s113
    %s131 = sphi 0, %s131
    %s133 = sphi 0, %s131
    %s134 = sphi 0, %s133
    %s148 = sphi 0, %s134
    %s152 = sphi 0, %s152
    %s154 = sphi 0, %s152
    %s155 = sphi 0, %s154
    %s169 = sphi 0, %s155
    %s175 = sphi 0, %s177
    %s178 = sphi 0, %s175
    %s179 = sphi 0, %s178
    %s195 = sphi 0, %s179
  $region4: #{fcnet_forward.1} parent=0 // loop_header_branch
    %16 = sbr.rel (%p14) target = $region8
  $region5: #{fcnet_forward.1} parent=0 // loop_body
    %s18 = ssub.s32 %s13, 1
    %s19 = ssub.s32 %s13, 2
    %s20 = sadd.s32 %s13, 1
    %s21 = ssub.s32 %s13, %s20
    %p22 = scmp.eq.s32.totalorder %s21, 0
    %s24 = sadd.s32 %s23, 1
    %s25 = scalar_select %p22, %s23, %s24
    %p28 = pneg %p22
    %p29 = scmp.eq.s32.totalorder %s13, 1
    %p30 = por %p28, %p29
    %p31 = scmp.ne.s32.totalorder %s23, %s26
    %p32 = scmp.eq.s32.totalorder %s13, 0
    %p33 = por %p31, %p32
    %p34 = scmp.ne.s32.totalorder %s23, %s26
    %p35 = scmp.eq.s32.totalorder %s18, 1
    %p36 = por %p34, %p35
    %p37 = scmp.ne.s32.totalorder %s26, %s27
    %p38 = scmp.eq.s32.totalorder %s18, 0
    %p39 = por %p37, %p38
    %p40 = scmp.ne.s32.totalorder %s26, %s27
    %p41 = scmp.eq.s32.totalorder %s19, 1
    %p42 = por %p40, %p41
    %p44 = scmp.ne.s32.totalorder %s27, %s43
    %p45 = scmp.eq.s32.totalorder %s19, 0
    %p46 = por %p44, %p45
    %s48 = sadd.s32 %s47, 1
    %p51 = scmp.eq.s32.totalorder %s13, 1
    %p52 = scmp.ne.s32.totalorder %s47, %s49
    %p53 = scmp.eq.s32.totalorder %s13, 0
    %p54 = por %p52, %p53
    %p55 = scmp.ne.s32.totalorder %s47, %s49
    %p56 = scmp.eq.s32.totalorder %s18, 1
    %p57 = por %p55, %p56
    %p58 = scmp.ne.s32.totalorder %s49, %s50
    %p59 = scmp.eq.s32.totalorder %s18, 0
    %p60 = por %p58, %p59
    %p61 = scmp.ne.s32.totalorder %s49, %s50
    %p62 = scmp.eq.s32.totalorder %s19, 1
    %p63 = por %p61, %p62
    %p65 = scmp.ne.s32.totalorder %s50, %s64
    %p66 = scmp.eq.s32.totalorder %s19, 0
    %p67 = por %p65, %p66
    %s69 = sadd.s32 %s68, 1
    %p72 = scmp.eq.s32.totalorder %s13, 1
    %p73 = scmp.ne.s32.totalorder %s68, %s70
    %p74 = scmp.eq.s32.totalorder %s13, 0
    %p75 = por %p73, %p74
    %p76 = scmp.ne.s32.totalorder %s68, %s70
    %p77 = scmp.eq.s32.totalorder %s18, 1
    %p78 = por %p76, %p77
    %p79 = scmp.ne.s32.totalorder %s70, %s71
    %p80 = scmp.eq.s32.totalorder %s18, 0
    %p81 = por %p79, %p80
    %p82 = scmp.ne.s32.totalorder %s70, %s71
    %p83 = scmp.eq.s32.totalorder %s19, 1
    %p84 = por %p82, %p83
    %p86 = scmp.ne.s32.totalorder %s71, %s85
    %p87 = scmp.eq.s32.totalorder %s19, 0
    %p88 = por %p86, %p87
    %s90 = sadd.s32 %s89, 1
    %p93 = scmp.eq.s32.totalorder %s13, 1
    %p94 = scmp.ne.s32.totalorder %s89, %s91
    %p95 = scmp.eq.s32.totalorder %s13, 0
    %p96 = por %p94, %p95
    %p97 = scmp.ne.s32.totalorder %s89, %s91
    %p98 = scmp.eq.s32.totalorder %s18, 1
    %p99 = por %p97, %p98
    %p100 = scmp.ne.s32.totalorder %s91, %s92
    %p101 = scmp.eq.s32.totalorder %s18, 0
    %p102 = por %p100, %p101
    %p103 = scmp.ne.s32.totalorder %s91, %s92
    %p104 = scmp.eq.s32.totalorder %s19, 1
    %p105 = por %p103, %p104
    %p107 = scmp.ne.s32.totalorder %s92, %s106
    %p108 = scmp.eq.s32.totalorder %s19, 0
    %p109 = por %p107, %p108
    %s111 = sadd.s32 %s110, 1
    %p114 = scmp.eq.s32.totalorder %s13, 1
    %p115 = scmp.ne.s32.totalorder %s110, %s112
    %p116 = scmp.eq.s32.totalorder %s13, 0
    %p117 = por %p115, %p116
    %p118 = scmp.ne.s32.totalorder %s110, %s112
    %p119 = scmp.eq.s32.totalorder %s18, 1
    %p120 = por %p118, %p119
    %p121 = scmp.ne.s32.totalorder %s112, %s113
    %p122 = scmp.eq.s32.totalorder %s18, 0
    %p123 = por %p121, %p122
    %p124 = scmp.ne.s32.totalorder %s112, %s113
    %p125 = scmp.eq.s32.totalorder %s19, 1
    %p126 = por %p124, %p125
    %p128 = scmp.ne.s32.totalorder %s113, %s127
    %p129 = scmp.eq.s32.totalorder %s19, 0
    %p130 = por %p128, %p129
    %s132 = sadd.s32 %s131, 1
    %p135 = scmp.eq.s32.totalorder %s13, 1
    %p136 = scmp.ne.s32.totalorder %s131, %s133
    %p137 = scmp.eq.s32.totalorder %s13, 0
    %p138 = por %p136, %p137
    %p139 = scmp.ne.s32.totalorder %s131, %s133
    %p140 = scmp.eq.s32.totalorder %s18, 1
    %p141 = por %p139, %p140
    %p142 = scmp.ne.s32.totalorder %s133, %s134
    %p143 = scmp.eq.s32.totalorder %s18, 0
    %p144 = por %p142, %p143
    %p145 = scmp.ne.s32.totalorder %s133, %s134
    %p146 = scmp.eq.s32.totalorder %s19, 1
    %p147 = por %p145, %p146
    %p149 = scmp.ne.s32.totalorder %s134, %s148
    %p150 = scmp.eq.s32.totalorder %s19, 0
    %p151 = por %p149, %p150
    %s153 = sadd.s32 %s152, 1
    %p156 = scmp.eq.s32.totalorder %s13, 1
    %p157 = scmp.ne.s32.totalorder %s152, %s154
    %p158 = scmp.eq.s32.totalorder %s13, 0
    %p159 = por %p157, %p158
    %p160 = scmp.ne.s32.totalorder %s152, %s154
    %p161 = scmp.eq.s32.totalorder %s18, 1
    %p162 = por %p160, %p161
    %p163 = scmp.ne.s32.totalorder %s154, %s155
    %p164 = scmp.eq.s32.totalorder %s18, 0
    %p165 = por %p163, %p164
    %p166 = scmp.ne.s32.totalorder %s154, %s155
    %p167 = scmp.eq.s32.totalorder %s19, 1
    %p168 = por %p166, %p167
    %p170 = scmp.ne.s32.totalorder %s155, %s169
    %p171 = scmp.eq.s32.totalorder %s19, 0
    %p172 = por %p170, %p171
    %s173 = ssub.s32 %s13, %s20
    %p174 = scmp.eq.s32.totalorder %s173, 0
    %s176 = sadd.s32 %s175, 1
    %s177 = scalar_select %p174, %s175, %s176
    %p180 = pneg %p174
    %p181 = scmp.eq.s32.totalorder %s13, 1
    %p182 = por %p180, %p181
    %p183 = scmp.ne.s32.totalorder %s175, %s178
    %p184 = scmp.eq.s32.totalorder %s13, 0
    %p185 = por %p183, %p184
    %p186 = scmp.ne.s32.totalorder %s175, %s178
    %p187 = scmp.eq.s32.totalorder %s18, 1
    %p188 = por %p186, %p187
    %p189 = scmp.ne.s32.totalorder %s178, %s179
    %p190 = scmp.eq.s32.totalorder %s18, 0
    %p191 = por %p189, %p190
    %p192 = scmp.ne.s32.totalorder %s178, %s179
    %p193 = scmp.eq.s32.totalorder %s19, 1
    %p194 = por %p192, %p193
    %p196 = scmp.ne.s32.totalorder %s179, %s195
    %p197 = scmp.eq.s32.totalorder %s19, 0
    %p198 = por %p196, %p197
    %p199 = scmp.le.s32.totalorder 1, %s13
    %p200 = scmp.lt.s32.totalorder %s13, 3
    %p201 = pnand %p199, %p200
    %p202 = pneg %p201
    // Predicated region
    $region9: #{fcnet_forward.1} parent=5 // pred_check
      _
    $region10: #{fcnet_forward.1} parent=5 // pred_check_branch
      %204 = sbr.rel (%p201) target = $region12
    $region11: #{fcnet_forward.1} parent=5 // pred_region
      %s205 = ssub.s32 %s13, 1
      // Predicated region
      $region13: #{fcnet_forward.1} parent=11 // pred_check
        %p206 = pneg %p60
      $region14: #{fcnet_forward.1} parent=11 // pred_check_branch
        %208 = sbr.rel (%p206) target = $region16
      $region15: #{fcnet_forward.1} parent=11 // pred_region
        _
      $region16: #{fcnet_forward.1} parent=11 // pred_fallthru
        _
      // Predicated region
      $region17: #{fcnet_forward.1} parent=11 // pred_check
        %p209 = pneg %p81
      $region18: #{fcnet_forward.1} parent=11 // pred_check_branch
        %211 = sbr.rel (%p209) target = $region20
      $region19: #{fcnet_forward.1} parent=11 // pred_region
        _
      $region20: #{fcnet_forward.1} parent=11 // pred_fallthru
        _
      // Predicated region
      $region21: #{fcnet_forward.1} parent=11 // pred_check
        %p212 = pneg %p102
      $region22: #{fcnet_forward.1} parent=11 // pred_check_branch
        %214 = sbr.rel (%p212) target = $region24
      $region23: #{fcnet_forward.1} parent=11 // pred_region
        _
      $region24: #{fcnet_forward.1} parent=11 // pred_fallthru
        _
      // Predicated region
      $region25: #{fcnet_forward.1} parent=11 // pred_check
        %p215 = pneg %p123
      $region26: #{fcnet_forward.1} parent=11 // pred_check_branch
        %217 = sbr.rel (%p215) target = $region28
      $region27: #{fcnet_forward.1} parent=11 // pred_region
        _
      $region28: #{fcnet_forward.1} parent=11 // pred_fallthru
        _
      // Predicated region
      $region29: #{fcnet_forward.1} parent=11 // pred_check
        %p218 = pneg %p144
      $region30: #{fcnet_forward.1} parent=11 // pred_check_branch
        %220 = sbr.rel (%p218) target = $region32
      $region31: #{fcnet_forward.1} parent=11 // pred_region
        _
      $region32: #{fcnet_forward.1} parent=11 // pred_fallthru
        _
      // Predicated region
      $region33: #{fcnet_forward.1} parent=11 // pred_check
        %p221 = pneg %p165
      $region34: #{fcnet_forward.1} parent=11 // pred_check_branch
        %223 = sbr.rel (%p221) target = $region36
      $region35: #{fcnet_forward.1} parent=11 // pred_region
        _
      $region36: #{fcnet_forward.1} parent=11 // pred_fallthru
        _
    $region12: #{fcnet_forward.1} parent=5 // pred_fallthru
      _
    %p224 = scmp.lt.s32.totalorder %s13, 2
    // Predicated region
    $region37: #{fcnet_forward.1} parent=5 // pred_check
      %p225 = pneg %p224
    $region38: #{fcnet_forward.1} parent=5 // pred_check_branch
      %227 = sbr.rel (%p225) target = $region40
    $region39: #{fcnet_forward.1} parent=5 // pred_region
      // Predicated region
      $region41: #{fcnet_forward.1} parent=39 // pred_check
        %p228 = pneg %p33
      $region42: #{fcnet_forward.1} parent=39 // pred_check_branch
        %230 = sbr.rel (%p228) target = $region44
      $region43: #{fcnet_forward.1} parent=39 // pred_region
        %s231 = smul.u32 6, %s13
        %p232 = scmp.lt.s32.totalorder %s231, 11
        %s233 = scalar_select %p232, %s231, 11
        %s234 = smul.addr %s233, 8
        %s235 = scalar_lea.vmem %s0, %s234
        %s236 = smul.u32 6, %s13
      $region44: #{fcnet_forward.1} parent=39 // pred_fallthru
        _
    $region40: #{fcnet_forward.1} parent=5 // pred_fallthru
      _
    %p237 = scmp.le.s32.totalorder 1, %s13
    %p238 = scmp.lt.s32.totalorder %s13, 3
    %p239 = pnand %p237, %p238
    %p240 = pneg %p239
    // Predicated region
    $region45: #{fcnet_forward.1} parent=5 // pred_check
      _
    $region46: #{fcnet_forward.1} parent=5 // pred_check_branch
      %242 = sbr.rel (%p239) target = $region48
    $region47: #{fcnet_forward.1} parent=5 // pred_region
      %s243 = ssub.s32 %s13, 1
      %s244 = smul.u32 6, %s18
      %p245 = scmp.lt.s32.totalorder %s244, 11
      %s246 = scalar_select %p245, %s244, 11
      %s247 = smul.addr %s246, 8
      %s248 = scalar_lea.vmem %s0, %s247
      %p249 = pneg %p39
      %p250 = pneg %p36
      %p251 = pneg %p60
      %p252 = pneg %p57
      %p253 = pneg %p81
      %p254 = pneg %p78
      %p255 = pneg %p102
      %p256 = pneg %p99
      %p257 = pneg %p123
      %p258 = pneg %p120
      %p259 = pneg %p144
      %p260 = pneg %p141
      %p261 = pneg %p165
      %p262 = pneg %p162
      %p263 = pneg %p191
      %p264 = pneg %p188
      %s265 = smul.u32 6, %s18
      %p266 = scmp.lt.s32.totalorder %s265, 11
      %s267 = scalar_select %p266, %s265, 11
      %s268 = smul.addr %s267, 8
      %s269 = scalar_lea.vmem %s7, %s268
      %s270 = smul.u32 6, %s18
      %p271 = scmp.lt.s32.totalorder %s270, 11
      %s272 = scalar_select %p271, %s270, 11
      %s273 = smul.addr %s272, 8
      %s274 = scalar_lea.vmem %s0, %s273
      %s275 = smul.u32 6, %s18
      %s276 = smul.u32 6, %s18
      %p277 = scmp.lt.s32.totalorder %s276, 11
      %s278 = scalar_select %p277, %s276, 11
      %s279 = smul.addr %s278, 8
      %s280 = scalar_lea.vmem %s7, %s279
      %s281 = smul.u32 6, %s18
      %v282 = vld [vmem:[%s274] sm:$0xff]
      %v283 = vld [vmem:[%s274 + $0x8] sm:$0xff]
      %v284 = vld [vmem:[%s274 + $0x10] sm:$0xff]
      %v285 = vld [vmem:[%s274 + $0x18] sm:$0xff]
      %v286 = vld [vmem:[%s274 + $0x20] sm:$0xff]
      %v287 = vld [vmem:[%s274 + $0x28] sm:$0xff]
      %v288 = vld [vmem:[%s1] sm:$0xff]
      %v289 = vld [vmem:[%s1 + $0x8] sm:$0xff]
      %v290 = vld [vmem:[%s2] sm:$0x1]
      %v292 = vperm.slane %v290, 0
      %vm294 = vcmask 130048
      %v296 = vsel %vm294, %v282, 0
      %v299 = vsel %vm294, %v283, 0
      %v302 = vsel %vm294, %v284, 0
      %v305 = vsel %vm294, %v285, 0
      %v308 = vsel %vm294, %v286, 0
      %v311 = vsel %vm294, %v287, 0
      %313 = vmatpush.msra.mxu0 0.0
      %314 = vmatpush.msra.mxu0 0.0
      %315 = vmatpush.msra.mxu0 0.0
      %316 = vmatpush.msra.mxu0 0.0
      %317 = vmatpush.msra.mxu0 0.0
      %318 = vmatpush.msra.mxu0 0.0
      %319 = vmatpush.msra.mxu0 0.0
      %320 = vmatpush.msra.mxu0 0.0
      %321 = vmatpush.msra.mxu0 0.0
      %322 = vmatpush.msra.mxu0 0.0
      %323 = vmatpush.msra.mxu0 0.0
      %324 = vmatpush.msra.mxu0 0.0
      %325 = vmatpush.msra.mxu0 0.0
      %326 = vmatpush.msra.mxu0 0.0
      %327 = vmatpush.msra.mxu0 %v289
      %328 = vmatpush.msra.mxu0 %v288
      %329 = vmatmul.f32.gmra.mxu0 %v296
      %v330 = vpop.f32.mrf.mxu0
      %v331 = vadd.f32 %v292, %v330
      %332 = vmatmul.f32.gmra.mxu0 %v299
      %v333 = vpop.f32.mrf.mxu0
      %v334 = vadd.f32 %v292, %v333
      %335 = vmatmul.f32.gmra.mxu0 %v302
      %v336 = vpop.f32.mrf.mxu0
      %v337 = vadd.f32 %v292, %v336
      %338 = vmatmul.f32.gmra.mxu0 %v305
      %v339 = vpop.f32.mrf.mxu0
      %v340 = vadd.f32 %v292, %v339
      %341 = vmatmul.f32.gmra.mxu0 %v308
      %v342 = vpop.f32.mrf.mxu0
      %v343 = vadd.f32 %v292, %v342
      %344 = vmatmul.f32.gmra.mxu0 %v311
      %v345 = vpop.f32.mrf.mxu0
      %v346 = vadd.f32 %v292, %v345
      %347 = vdwg.mxu0
      %v348 = vmax.f32 %v331, 0.0
      %v349 = vmax.f32 %v334, 0.0
      %v350 = vmax.f32 %v337, 0.0
      %v351 = vmax.f32 %v340, 0.0
      %v352 = vmax.f32 %v343, 0.0
      %v353 = vmax.f32 %v346, 0.0
      %v354 = vld [vmem:[%s3] sm:$0xff]
      %v355 = vld [vmem:[%s3 + $0x8] sm:$0xff]
      %v356 = vld [vmem:[%s3 + $0x10] sm:$0xff]
      %v357 = vld [vmem:[%s3 + $0x18] sm:$0xff]
      %v358 = vld [vmem:[%s3 + $0x20] sm:$0xff]
      %v359 = vld [vmem:[%s3 + $0x28] sm:$0xff]
      %v360 = vld [vmem:[%s3 + $0x30] sm:$0xff]
      %v361 = vld [vmem:[%s3 + $0x38] sm:$0xff]
      %v362 = vld [vmem:[%s3 + $0x40] sm:$0xff]
      %v363 = vld [vmem:[%s3 + $0x48] sm:$0xff]
      %v364 = vld [vmem:[%s3 + $0x50] sm:$0xff]
      %v365 = vld [vmem:[%s3 + $0x58] sm:$0xff]
      %v366 = vld [vmem:[%s3 + $0x60] sm:$0xff]
      %v367 = vld [vmem:[%s3 + $0x68] sm:$0xff]
      %v368 = vld [vmem:[%s3 + $0x70] sm:$0xff]
      %v369 = vld [vmem:[%s3 + $0x78] sm:$0xff]
      %v370 = vld [vmem:[%s4] sm:$0x1]
      %v372 = vperm.slane %v370, 0
      %374 = vmatpush.msra.mxu0 %v369
      %375 = vmatpush.msra.mxu0 %v368
      %376 = vmatpush.msra.mxu0 %v367
      %377 = vmatpush.msra.mxu0 %v366
      %378 = vmatpush.msra.mxu0 %v365
      %379 = vmatpush.msra.mxu0 %v364
      %380 = vmatpush.msra.mxu0 %v363
      %381 = vmatpush.msra.mxu0 %v362
      %382 = vmatpush.msra.mxu0 %v361
      %383 = vmatpush.msra.mxu0 %v360
      %384 = vmatpush.msra.mxu0 %v359
      %385 = vmatpush.msra.mxu0 %v358
      %386 = vmatpush.msra.mxu0 %v357
      %387 = vmatpush.msra.mxu0 %v356
      %388 = vmatpush.msra.mxu0 %v355
      %389 = vmatpush.msra.mxu0 %v354
      %390 = vmatmul.f32.gmra.mxu0 %v348
      %v391 = vpop.f32.mrf.mxu0
      %v392 = vadd.f32 %v372, %v391
      %393 = vmatmul.f32.gmra.mxu0 %v349
      %v394 = vpop.f32.mrf.mxu0
      %v395 = vadd.f32 %v372, %v394
      %396 = vmatmul.f32.gmra.mxu0 %v350
      %v397 = vpop.f32.mrf.mxu0
      %v398 = vadd.f32 %v372, %v397
      %399 = vmatmul.f32.gmra.mxu0 %v351
      %v400 = vpop.f32.mrf.mxu0
      %v401 = vadd.f32 %v372, %v400
      %402 = vmatmul.f32.gmra.mxu0 %v352
      %v403 = vpop.f32.mrf.mxu0
      %v404 = vadd.f32 %v372, %v403
      %405 = vmatmul.f32.gmra.mxu0 %v353
      %v406 = vpop.f32.mrf.mxu0
      %v407 = vadd.f32 %v372, %v406
      %408 = vdwg.mxu0
      %v409 = vmax.f32 %v392, 0.0
      %v410 = vmax.f32 %v395, 0.0
      %v411 = vmax.f32 %v398, 0.0
      %v412 = vmax.f32 %v401, 0.0
      %v413 = vmax.f32 %v404, 0.0
      %v414 = vmax.f32 %v407, 0.0
      %v415 = vld [vmem:[%s5] sm:$0xff]
      %v416 = vld [vmem:[%s5 + $0x8] sm:$0xff]
      %v417 = vld [vmem:[%s5 + $0x10] sm:$0xff]
      %v418 = vld [vmem:[%s5 + $0x18] sm:$0xff]
      %v419 = vld [vmem:[%s5 + $0x20] sm:$0xff]
      %v420 = vld [vmem:[%s5 + $0x28] sm:$0xff]
      %v421 = vld [vmem:[%s5 + $0x30] sm:$0xff]
      %v422 = vld [vmem:[%s5 + $0x38] sm:$0xff]
      %v423 = vld [vmem:[%s5 + $0x40] sm:$0xff]
      %v424 = vld [vmem:[%s5 + $0x48] sm:$0xff]
      %v425 = vld [vmem:[%s5 + $0x50] sm:$0xff]
      %v426 = vld [vmem:[%s5 + $0x58] sm:$0xff]
      %v427 = vld [vmem:[%s5 + $0x60] sm:$0xff]
      %v428 = vld [vmem:[%s5 + $0x68] sm:$0xff]
      %v429 = vld [vmem:[%s5 + $0x70] sm:$0xff]
      %v430 = vld [vmem:[%s5 + $0x78] sm:$0xff]
      %v431 = vld [vmem:[%s6] sm:$0x1]
      %v433 = vperm.slane %v431, 0
      %435 = vmatpush.msra.mxu0 %v430
      %436 = vmatpush.msra.mxu0 %v429
      %437 = vmatpush.msra.mxu0 %v428
      %438 = vmatpush.msra.mxu0 %v427
      %439 = vmatpush.msra.mxu0 %v426
      %440 = vmatpush.msra.mxu0 %v425
      %441 = vmatpush.msra.mxu0 %v424
      %442 = vmatpush.msra.mxu0 %v423
      %443 = vmatpush.msra.mxu0 %v422
      %444 = vmatpush.msra.mxu0 %v421
      %445 = vmatpush.msra.mxu0 %v420
      %446 = vmatpush.msra.mxu0 %v419
      %447 = vmatpush.msra.mxu0 %v418
      %448 = vmatpush.msra.mxu0 %v417
      %449 = vmatpush.msra.mxu0 %v416
      %450 = vmatpush.msra.mxu0 %v415
      %451 = vmatmul.f32.gmra.mxu0 %v409
      %v452 = vpop.f32.mrf.mxu0
      %v453 = vadd.f32 %v433, %v452
      %454 = vmatmul.f32.gmra.mxu0 %v410
      %v455 = vpop.f32.mrf.mxu0
      %v456 = vadd.f32 %v433, %v455
      %457 = vmatmul.f32.gmra.mxu0 %v411
      %v458 = vpop.f32.mrf.mxu0
      %v459 = vadd.f32 %v433, %v458
      %460 = vmatmul.f32.gmra.mxu0 %v412
      %v461 = vpop.f32.mrf.mxu0
      %v462 = vadd.f32 %v433, %v461
      %463 = vmatmul.f32.gmra.mxu0 %v413
      %v464 = vpop.f32.mrf.mxu0
      %v465 = vadd.f32 %v433, %v464
      %466 = vmatmul.f32.gmra.mxu0 %v414
      %v467 = vpop.f32.mrf.mxu0
      %v468 = vadd.f32 %v433, %v467
      %469 = vdwg.mxu0
      %vm470 = vcmask 64512
      %v471 = vsel %vm470, %v453, -inf
      %472 = vmax.xlane.f32.xlu0 %v471
      %v473 = vpop.xlane.xlu0 %472
      %v474 = vsel %vm470, %v456, -inf
      %475 = vmax.xlane.f32.xlu0 %v474
      %v476 = vpop.xlane.xlu0 %475
      %v477 = vsel %vm470, %v459, -inf
      %478 = vmax.xlane.f32.xlu0 %v477
      %v479 = vpop.xlane.xlu0 %478
      %v480 = vsel %vm470, %v462, -inf
      %481 = vmax.xlane.f32.xlu0 %v480
      %v482 = vpop.xlane.xlu0 %481
      %v483 = vsel %vm470, %v465, -inf
      %484 = vmax.xlane.f32.xlu0 %v483
      %v485 = vpop.xlane.xlu0 %484
      %v486 = vsel %vm470, %v468, -inf
      %487 = vmax.xlane.f32.xlu0 %v486
      %v488 = vpop.xlane.xlu0 %487
      %v489 = vsub.f32 %v453, %v473
      %v490 = vsub.f32 %v456, %v476
      %v491 = vsub.f32 %v459, %v479
      %v492 = vsub.f32 %v462, %v482
      %v493 = vsub.f32 %v465, %v485
      %v494 = vsub.f32 %v468, %v488
      %v495 = vmul.f32 %v489, 1.442695
      %v496 = vpow.pop %v495
      %v497 = vmul.f32 %v490, 1.442695
      %v498 = vpow.pop %v497
      %v499 = vmul.f32 %v491, 1.442695
      %v500 = vpow.pop %v499
      %v501 = vmul.f32 %v492, 1.442695
      %v502 = vpow.pop %v501
      %v503 = vmul.f32 %v493, 1.442695
      %v504 = vpow.pop %v503
      %v505 = vmul.f32 %v494, 1.442695
      %v506 = vpow.pop %v505
      %v507 = vsel %vm470, %v496, 0.0
      %508 = vadd.xlane.f32.xlu0 %v507
      %v509 = vpop.xlane.xlu0 %508
      %v510 = vsel %vm470, %v498, 0.0
      %511 = vadd.xlane.f32.xlu0 %v510
      %v512 = vpop.xlane.xlu0 %511
      %v513 = vsel %vm470, %v500, 0.0
      %514 = vadd.xlane.f32.xlu0 %v513
      %v515 = vpop.xlane.xlu0 %514
      %v516 = vsel %vm470, %v502, 0.0
      %517 = vadd.xlane.f32.xlu0 %v516
      %v518 = vpop.xlane.xlu0 %517
      %v519 = vsel %vm470, %v504, 0.0
      %520 = vadd.xlane.f32.xlu0 %v519
      %v521 = vpop.xlane.xlu0 %520
      %v522 = vsel %vm470, %v506, 0.0
      %523 = vadd.xlane.f32.xlu0 %v522
      %v524 = vpop.xlane.xlu0 %523
      %v525 = vrcp.pop %v509
      %v526 = vrcp.pop %v512
      %v527 = vrcp.pop %v515
      %v528 = vrcp.pop %v518
      %v529 = vrcp.pop %v521
      %v530 = vrcp.pop %v524
      %v531 = vmul.f32 %v509, %v525
      %v532 = vmul.f32 %v512, %v526
      %v533 = vmul.f32 %v515, %v527
      %v534 = vmul.f32 %v518, %v528
      %v535 = vmul.f32 %v521, %v529
      %v536 = vmul.f32 %v524, %v530
      %v537 = vsub.f32 2.0, %v531
      %v538 = vsub.f32 2.0, %v532
      %v539 = vsub.f32 2.0, %v533
      %v540 = vsub.f32 2.0, %v534
      %v541 = vsub.f32 2.0, %v535
      %v542 = vsub.f32 2.0, %v536
      %v543 = vmul.f32 %v525, %v537
      %v544 = vmul.f32 %v526, %v538
      %v545 = vmul.f32 %v527, %v539
      %v546 = vmul.f32 %v528, %v540
      %v547 = vmul.f32 %v529, %v541
      %v548 = vmul.f32 %v530, %v542
      %v549 = vmul.f32 %v496, %v543
      %v550 = vmul.f32 %v498, %v544
      %v551 = vmul.f32 %v500, %v545
      %v552 = vmul.f32 %v502, %v546
      %v553 = vmul.f32 %v504, %v547
      %v554 = vmul.f32 %v506, %v548
      %555 = vst.msk [vmem:[%s280] sm:$0xff] %vm470, %v549
      %556 = vst.msk [vmem:[%s280 + $0x8] sm:$0xff] %vm470, %v550
      %557 = vst.msk [vmem:[%s280 + $0x10] sm:$0xff] %vm470, %v551
      %558 = vst.msk [vmem:[%s280 + $0x18] sm:$0xff] %vm470, %v552
      %559 = vst.msk [vmem:[%s280 + $0x20] sm:$0xff] %vm470, %v553
      %560 = vst.msk [vmem:[%s280 + $0x28] sm:$0xff] %vm470, %v554
      %s561 = smul.u32 6, %s18
      %p562 = scmp.lt.s32.totalorder %s561, 11
      %s563 = scalar_select %p562, %s561, 11
      %s564 = smul.addr %s563, 8
      %s565 = scalar_lea.vmem %s7, %s564
      // Predicated region
      $region49: #{fcnet_forward.1} parent=47 // pred_check
        %p566 = pneg %p188
      $region50: #{fcnet_forward.1} parent=47 // pred_check_branch
        %568 = sbr.rel (%p566) target = $region52
      $region51: #{fcnet_forward.1} parent=47 // pred_region
        %s569 = smul.u32 6, %s18
      $region52: #{fcnet_forward.1} parent=47 // pred_fallthru
        _
    $region48: #{fcnet_forward.1} parent=5 // pred_fallthru
      _
    %p570 = scmp.le.s32.totalorder 2, %s13
    // Predicated region
    $region53: #{fcnet_forward.1} parent=5 // pred_check
      %p571 = pneg %p570
    $region54: #{fcnet_forward.1} parent=5 // pred_check_branch
      %573 = sbr.rel (%p571) target = $region56
    $region55: #{fcnet_forward.1} parent=5 // pred_region
      %s574 = ssub.s32 %s13, 2
      // Predicated region
      $region57: #{fcnet_forward.1} parent=55 // pred_check
        %p575 = pneg %p194
      $region58: #{fcnet_forward.1} parent=55 // pred_check_branch
        %577 = sbr.rel (%p575) target = $region60
      $region59: #{fcnet_forward.1} parent=55 // pred_region
        %s578 = smul.u32 6, %s19
        %p579 = scmp.lt.s32.totalorder %s578, 11
        %s580 = scalar_select %p579, %s578, 11
        %s581 = smul.addr %s580, 8
        %s582 = scalar_lea.vmem %s7, %s581
      $region60: #{fcnet_forward.1} parent=55 // pred_fallthru
        _
    $region56: #{fcnet_forward.1} parent=5 // pred_fallthru
      _
  $region6: #{fcnet_forward.1} parent=0 // loop_footer
    %s17 = sadd.s32 1, %s13
  $region7: #{fcnet_forward.1} parent=0 // loop_footer_branch
    %12 = sbr.rel target = $region3
  $region8: #{fcnet_forward.1} parent=0 // loop_exit
    _

</llo_original>
